<compile_context>
chip_gen: v5e
topology: v5e:2x2
jax: 0.10.0
libtpu: 0.0.40
codegen_flags: <defaults>
</compile_context>

<pallas_src>
import functools

import jax
import jax.numpy as jnp
from jax.experimental import pallas as pl
from jax.experimental.pallas import tpu as pltpu


_VMEM_LIMIT_BYTES = 48 * 1024 * 1024      # safe on v5e/v6e (128 MiB) and v7x (64 MiB)
_FUSED_VMEM_BUDGET = 40 * 1024 * 1024     # take the fused path below this estimate
_TWO_PASS_TILE_BUDGET = 24 * 1024 * 1024  # budget for 4 * C * tile_hw * itemsize


# ---------------------------------------------------------------------------
# Excitation: FC -> ReLU -> FC -> sigmoid, in the C-on-sublanes layout.
#   pooled_col (C,1) f32, w1t (C,r), b1_row (1,r), w2 (C,r), b2_col (C,1)
# Implemented as broadcast-multiply + reduces (VPU/XLU only; MXU idle anyway).
# ---------------------------------------------------------------------------
def _excite(pooled_col, w1t, b1_row, w2, b2_col):
    h = jnp.sum(w1t * pooled_col, axis=0, keepdims=True) + b1_row   # (1, r)
    h = jnp.maximum(h, 0.0)
    z = jnp.sum(w2 * h, axis=1, keepdims=True) + b2_col             # (C, 1)
    return jax.nn.sigmoid(z)                                        # (C, 1), f32


# ---------------------------------------------------------------------------
# Fused single-pass kernel: grid=(B,), x block (1, C, HW) read once from HBM.
# ---------------------------------------------------------------------------
def _se_fused_kernel(x_ref, w1t_ref, b1_ref, w2_ref, b2_ref, o_ref, *, inv_hw):
    pooled = jnp.sum(x_ref[...].astype(jnp.float32), axis=2,
                     keepdims=True)[0] * inv_hw                     # (C, 1) f32
    gate = _excite(pooled, w1t_ref[...], b1_ref[...], w2_ref[...], b2_ref[...])
    # Scale in the I/O dtype (bf16 stays bf16 on v6e/v7x; f32 stays f32).
    o_ref[...] = x_ref[...] * gate[None].astype(o_ref.dtype)        # (1, C, HW)


# ---------------------------------------------------------------------------
# Two-pass fallback, pass A: tiled pool + excitation fused.
#   grid = (B, n_hw), HW chunks innermost ("arbitrary"); gate emitted at the
#   last chunk.  Ragged HW handled by masking the remainder chunk.
# ---------------------------------------------------------------------------
def _se_pool_gate_kernel(x_ref, w1t_ref, b1_ref, w2_ref, b2_ref, gate_ref,
                         acc_ref, *, inv_hw, hw, tile_hw, need_mask):
    h_idx = pl.program_id(1)

    @pl.when(h_idx == 0)
    def _():
        acc_ref[...] = jnp.zeros_like(acc_ref)

    xf = x_ref[...].astype(jnp.float32)                             # (1, C, tile_hw)
    if need_mask:
        col = jax.lax.broadcasted_iota(jnp.int32, xf.shape, 2) + h_idx * tile_hw
        xf = jnp.where(col < hw, xf, 0.0)
    acc_ref[...] += jnp.sum(xf, axis=2, keepdims=True)              # (1, C, 1)

    @pl.when(h_idx == pl.num_programs(1) - 1)
    def _():
        pooled = acc_ref[0] * inv_hw                                # (C, 1)
        gate_ref[...] = _excite(pooled, w1t_ref[...], b1_ref[...],
                                w2_ref[...], b2_ref[...])[None]     # (1, C, 1)


# ---------------------------------------------------------------------------
# Two-pass fallback, pass B: scale.  Purely bandwidth-bound, fully parallel.
# ---------------------------------------------------------------------------
def _se_scale_kernel(gate_ref, x_ref, o_ref):
    x = x_ref[...]                                                  # (1, C, tile_hw)
    o_ref[...] = x * gate_ref[...].astype(x.dtype)                  # gate (1, C, 1)


def _pick_hw_tile(hw, c, itemsize, budget_bytes, max_tile=None):
    """VMEM-aware HW tile (lane axis): multiple of 128, or the full extent."""
    per_col = 4 * c * itemsize                     # x in + out, double-buffered
    cap = max(128, (budget_bytes // per_col) // 128 * 128)
    if max_tile is not None:
        cap = min(cap, max(128, (max_tile // 128) * 128))
    return hw if hw <= cap else cap


def se_block(x, w1, b1, w2, b2, *, force_two_pass=False, max_hw_tile=None):
    """SEBlock forward.

    x : (B, C, H, W) float32 or bfloat16 (NCHW, PyTorch convention)
    w1: (r, C) fc1.weight, b1: (r,) fc1.bias
    w2: (C, r) fc2.weight, b2: (C,) fc2.bias
    returns (B, C, H, W) in x.dtype
    """
    B, C, H, W = x.shape
    r = w1.shape[0]
    HW = H * W
    x_r = x.reshape(B, C, HW)                     # free trailing-dim merge

    w1t = w1.T.astype(jnp.float32)                # (C, r)
    w2f = w2.astype(jnp.float32)                  # (C, r)
    b1r = b1.reshape(1, r).astype(jnp.float32)    # (1, r)
    b2c = b2.reshape(C, 1).astype(jnp.float32)    # (C, 1)

    itemsize = jnp.dtype(x.dtype).itemsize
    weight_bytes = (2 * C * r + r + C) * 4
    inv_hw = 1.0 / HW

    # ---- fused single-pass path: x is read from HBM exactly once ----------
    fused_vmem = 4 * C * HW * itemsize + 2 * weight_bytes
    if not force_two_pass and fused_vmem <= _FUSED_VMEM_BUDGET:
        out_r = pl.pallas_call(
            functools.partial(_se_fused_kernel, inv_hw=inv_hw),
            out_shape=jax.ShapeDtypeStruct((B, C, HW), x.dtype),
            grid=(B,),
            in_specs=[
                pl.BlockSpec((1, C, HW), lambda b: (b, 0, 0)),  # x slab
                pl.BlockSpec((C, r), lambda b: (0, 0)),         # w1^T (resident)
                pl.BlockSpec((1, r), lambda b: (0, 0)),         # b1
                pl.BlockSpec((C, r), lambda b: (0, 0)),         # w2
                pl.BlockSpec((C, 1), lambda b: (0, 0)),         # b2
            ],
            out_specs=pl.BlockSpec((1, C, HW), lambda b: (b, 0, 0)),
            compiler_params=pltpu.CompilerParams(
                dimension_semantics=("parallel",),              # B shards on v7x's 2 TCs
                vmem_limit_bytes=_VMEM_LIMIT_BYTES),
        )(x_r, w1t, b1r, w2f, b2c)
        return out_r.reshape(B, C, H, W)

    # ---- two-pass fallback for per-batch slabs that don't fit VMEM --------
    tile_hw = _pick_hw_tile(HW, C, itemsize, _TWO_PASS_TILE_BUDGET, max_hw_tile)
    n_hw = pl.cdiv(HW, tile_hw)
    need_mask = (HW % tile_hw) != 0

    # Pass A: tiled global average pool + excitation -> gate[B, C, 1] (f32).
    # Note: for B < num_cores on v7x this pass runs on a single TC; the fused
    # path above covers most such shapes.
    gate = pl.pallas_call(
        functools.partial(_se_pool_gate_kernel, inv_hw=inv_hw, hw=HW,
                          tile_hw=tile_hw, need_mask=need_mask),
        out_shape=jax.ShapeDtypeStruct((B, C, 1), jnp.float32),
        grid=(B, n_hw),
        in_specs=[
            pl.BlockSpec((1, C, tile_hw), lambda b, h: (b, 0, h)),
            pl.BlockSpec((C, r), lambda b, h: (0, 0)),
            pl.BlockSpec((1, r), lambda b, h: (0, 0)),
            pl.BlockSpec((C, r), lambda b, h: (0, 0)),
            pl.BlockSpec((C, 1), lambda b, h: (0, 0)),
        ],
        out_specs=pl.BlockSpec((1, C, 1), lambda b, h: (b, 0, 0)),
        scratch_shapes=[pltpu.VMEM((1, C, 1), jnp.float32)],
        compiler_params=pltpu.CompilerParams(
            dimension_semantics=("parallel", "arbitrary"),
            vmem_limit_bytes=_VMEM_LIMIT_BYTES),
    )(x_r, w1t, b1r, w2f, b2c)

    # Pass B: scale, fully parallel bandwidth-bound pass.
    out_r = pl.pallas_call(
        _se_scale_kernel,
        out_shape=jax.ShapeDtypeStruct((B, C, HW), x.dtype),
        grid=(B, n_hw),
        in_specs=[
            pl.BlockSpec((1, C, 1), lambda b, h: (b, 0, 0)),        # gate
            pl.BlockSpec((1, C, tile_hw), lambda b, h: (b, 0, h)),  # x
        ],
        out_specs=pl.BlockSpec((1, C, tile_hw), lambda b, h: (b, 0, h)),
        compiler_params=pltpu.CompilerParams(
            dimension_semantics=("parallel", "parallel"),
            vmem_limit_bytes=_VMEM_LIMIT_BYTES),
    )(gate, x_r)

    return out_r.reshape(B, C, H, W)


def se_block_ref(x, w1, b1, w2, b2):
    """Pure-JAX reference matching PyTorch SEBlock semantics."""
    xf = x.astype(jnp.float32)
    pooled = jnp.mean(xf, axis=(2, 3))                                   # (B, C)
    h = jnp.maximum(pooled @ w1.T.astype(jnp.float32) + b1, 0.0)         # (B, r)
    y = jax.nn.sigmoid(h @ w2.T.astype(jnp.float32) + b2)                # (B, C)
    return (xf * y[:, :, None, None]).astype(x.dtype)


if __name__ == "__main__":
    key = jax.random.PRNGKey(0)

    def make(B, C, H, W, reduction=16, dtype=jnp.float32, salt=0):
        r = max(1, C // reduction)
        kx, k1, k2, k3, k4 = jax.random.split(jax.random.fold_in(key, salt), 5)
        x = jax.random.normal(kx, (B, C, H, W), dtype=jnp.float32).astype(dtype)
        w1 = jax.random.normal(k1, (r, C), dtype=jnp.float32) * 0.5
        b1 = jax.random.normal(k2, (r,), dtype=jnp.float32) * 0.1
        w2 = jax.random.normal(k3, (C, r), dtype=jnp.float32) * 0.5
        b2 = jax.random.normal(k4, (C,), dtype=jnp.float32) * 0.1
        return x, w1, b1, w2, b2

    # SEBlock(channels=4, reduction=16) -> r = 1; B=2, 16x16 spatial.
    args = make(2, 4, 16, 16, salt=0)
    ref = se_block_ref(*args)

    # 1) fused single-pass path (default): x read from HBM exactly once.
    out = jax.block_until_ready(se_block(*args))
    assert out.shape == args[0].shape and out.dtype == args[0].dtype
    assert jnp.allclose(out, ref, atol=1e-4, rtol=1e-4), "fused path mismatch"

    # 2) two-pass fallback, even HW tiling (2 chunks -> exercises accumulation).
    out2 = jax.block_until_ready(
        se_block(*args, force_two_pass=True, max_hw_tile=128))
    assert jnp.allclose(out2, ref, atol=1e-4, rtol=1e-4), "two-pass mismatch"

    # 3) two-pass fallback, ragged HW (15x17=255 -> masked remainder chunk).
    args3 = make(2, 4, 15, 17, salt=3)
    ref3 = se_block_ref(*args3)
    out3 = jax.block_until_ready(
        se_block(*args3, force_two_pass=True, max_hw_tile=128))
    assert jnp.allclose(out3, ref3, atol=1e-4, rtol=1e-4), "ragged path mismatch"

    # 4) bf16 I/O through the fused path (scale stays in bf16).
    args4 = make(2, 4, 16, 16, dtype=jnp.bfloat16, salt=4)
    ref4 = se_block_ref(*args4)
    out4 = jax.block_until_ready(se_block(*args4))
    assert out4.dtype == jnp.bfloat16
    assert jnp.allclose(out4.astype(jnp.float32), ref4.astype(jnp.float32),
                        atol=5e-2, rtol=5e-2), "bf16 path mismatch"

    print("KERNEL_OK")
</pallas_src>

<mosaic_0001>
module attributes {stable_mosaic.version = 11 : i64} {
  func.func @_se_fused_kernel(%arg0: i32, %arg1: memref<1x4x256xf32, #tpu.memory_space<vmem>>, %arg2: memref<4x1xf32, #tpu.memory_space<vmem>>, %arg3: memref<1x1xf32, #tpu.memory_space<vmem>>, %arg4: memref<4x1xf32, #tpu.memory_space<vmem>>, %arg5: memref<4x1xf32, #tpu.memory_space<vmem>>, %arg6: memref<1x4x256xf32, #tpu.memory_space<vmem>>) attributes {dimension_semantics = [#tpu.dimension_semantics<parallel>], iteration_bounds = array<i64: 2>, scalar_prefetch = 0 : i64, scratch_operands = 0 : i64, tpu.core_type = #tpu.core_type<tc>, window_params = [{transform_indices = @transform_0, window_bounds = array<i64: 1, 4, 256>}, {pipeline_mode = #tpu.pipeline_mode<synchronous>, transform_indices = @transform_1, window_bounds = array<i64: 4, 1>}, {pipeline_mode = #tpu.pipeline_mode<synchronous>, transform_indices = @transform_2, window_bounds = array<i64: 1, 1>}, {pipeline_mode = #tpu.pipeline_mode<synchronous>, transform_indices = @transform_3, window_bounds = array<i64: 4, 1>}, {pipeline_mode = #tpu.pipeline_mode<synchronous>, transform_indices = @transform_4, window_bounds = array<i64: 4, 1>}, {transform_indices = @transform_5, window_bounds = array<i64: 1, 4, 256>}]} {
    %c0 = arith.constant 0 : index
    %c0_0 = arith.constant 0 : index
    %c0_1 = arith.constant 0 : index
    %0 = vector.load %arg1[%c0, %c0_0, %c0_1] : memref<1x4x256xf32, #tpu.memory_space<vmem>>, vector<1x4x256xf32>
    %cst = arith.constant dense<0.000000e+00> : vector<1x4xf32>
    %1 = vector.multi_reduction <add>, %0, %cst [2] : vector<1x4x256xf32> to vector<1x4xf32>
    %2 = vector.shape_cast %1 : vector<1x4xf32> to vector<1x4x1xf32>
    %3 = vector.shape_cast %2 : vector<1x4x1xf32> to vector<4x1xf32>
    %cst_2 = arith.constant 3.906250e-03 : f32
    %4 = vector.broadcast %cst_2 : f32 to vector<4x1xf32>
    %5 = arith.mulf %3, %4 : vector<4x1xf32>
    %c0_3 = arith.constant 0 : index
    %c0_4 = arith.constant 0 : index
    %6 = vector.load %arg2[%c0_3, %c0_4] : memref<4x1xf32, #tpu.memory_space<vmem>>, vector<4x1xf32>
    %c0_5 = arith.constant 0 : index
    %c0_6 = arith.constant 0 : index
    %7 = vector.load %arg3[%c0_5, %c0_6] : memref<1x1xf32, #tpu.memory_space<vmem>>, vector<1x1xf32>
    %c0_7 = arith.constant 0 : index
    %c0_8 = arith.constant 0 : index
    %8 = vector.load %arg4[%c0_7, %c0_8] : memref<4x1xf32, #tpu.memory_space<vmem>>, vector<4x1xf32>
    %c0_9 = arith.constant 0 : index
    %c0_10 = arith.constant 0 : index
    %9 = vector.load %arg5[%c0_9, %c0_10] : memref<4x1xf32, #tpu.memory_space<vmem>>, vector<4x1xf32>
    %10 = arith.mulf %6, %5 : vector<4x1xf32>
    %cst_11 = arith.constant dense<0.000000e+00> : vector<1xf32>
    %11 = vector.multi_reduction <add>, %10, %cst_11 [0] : vector<4x1xf32> to vector<1xf32>
    %12 = vector.shape_cast %11 : vector<1xf32> to vector<1x1xf32>
    %13 = arith.addf %12, %7 : vector<1x1xf32>
    %cst_12 = arith.constant 0.000000e+00 : f32
    %14 = vector.broadcast %cst_12 : f32 to vector<1x1xf32>
    %15 = arith.maximumf %13, %14 : vector<1x1xf32>
    %16 = vector.broadcast %15 : vector<1x1xf32> to vector<4x1xf32>
    %17 = arith.mulf %8, %16 : vector<4x1xf32>
    %cst_13 = arith.constant dense<0.000000e+00> : vector<4xf32>
    %18 = vector.multi_reduction <add>, %17, %cst_13 [1] : vector<4x1xf32> to vector<4xf32>
    %19 = vector.shape_cast %18 : vector<4xf32> to vector<4x1xf32>
    %20 = arith.addf %19, %9 : vector<4x1xf32>
    %21 = arith.negf %20 : vector<4x1xf32>
    %22 = math.exp %21 : vector<4x1xf32>
    %cst_14 = arith.constant 1.000000e+00 : f32
    %23 = vector.broadcast %cst_14 : f32 to vector<4x1xf32>
    %24 = arith.addf %23, %22 : vector<4x1xf32>
    %25 = arith.divf %23, %24 : vector<4x1xf32>
    %c0_15 = arith.constant 0 : index
    %c0_16 = arith.constant 0 : index
    %c0_17 = arith.constant 0 : index
    %26 = vector.load %arg1[%c0_15, %c0_16, %c0_17] : memref<1x4x256xf32, #tpu.memory_space<vmem>>, vector<1x4x256xf32>
    %27 = vector.shape_cast %25 : vector<4x1xf32> to vector<1x4x1xf32>
    %28 = vector.broadcast %27 : vector<1x4x1xf32> to vector<1x4x256xf32>
    %29 = arith.mulf %26, %28 : vector<1x4x256xf32>
    %c0_18 = arith.constant 0 : index
    %c0_19 = arith.constant 0 : index
    %c0_20 = arith.constant 0 : index
    %30 = vector.load %arg6[%c0_18, %c0_19, %c0_20] : memref<1x4x256xf32, #tpu.memory_space<vmem>>, vector<1x4x256xf32>
    tpu.vector_store %arg6[%c0_18, %c0_19, %c0_20], %29 {strides = array<i32>} : memref<1x4x256xf32, #tpu.memory_space<vmem>>, vector<1x4x256xf32>,
    return
  }
  func.func @transform_0(%arg0: i32) -> (i32, i32, i32) {
    %c0_i32 = arith.constant 0 : i32
    %c0_i32_0 = arith.constant 0 : i32
    %c0_i32_1 = arith.constant 0 : i32
    return %arg0, %c0_i32, %c0_i32_0 : i32, i32, i32
  }
  func.func @transform_1(%arg0: i32) -> (i32, i32) {
    %c0_i32 = arith.constant 0 : i32
    %c0_i32_0 = arith.constant 0 : i32
    %c0_i32_1 = arith.constant 0 : i32
    return %c0_i32, %c0_i32_0 : i32, i32
  }
  func.func @transform_2(%arg0: i32) -> (i32, i32) {
    %c0_i32 = arith.constant 0 : i32
    %c0_i32_0 = arith.constant 0 : i32
    %c0_i32_1 = arith.constant 0 : i32
    return %c0_i32, %c0_i32_0 : i32, i32
  }
  func.func @transform_3(%arg0: i32) -> (i32, i32) {
    %c0_i32 = arith.constant 0 : i32
    %c0_i32_0 = arith.constant 0 : i32
    %c0_i32_1 = arith.constant 0 : i32
    return %c0_i32, %c0_i32_0 : i32, i32
  }
  func.func @transform_4(%arg0: i32) -> (i32, i32) {
    %c0_i32 = arith.constant 0 : i32
    %c0_i32_0 = arith.constant 0 : i32
    %c0_i32_1 = arith.constant 0 : i32
    return %c0_i32, %c0_i32_0 : i32, i32
  }
  func.func @transform_5(%arg0: i32) -> (i32, i32, i32) {
    %c0_i32 = arith.constant 0 : i32
    %c0_i32_0 = arith.constant 0 : i32
    %c0_i32_1 = arith.constant 0 : i32
    return %arg0, %c0_i32, %c0_i32_0 : i32, i32, i32
  }
}

</mosaic_0001>

<llo_original>
// kernel: tpu_custom_call.1
$region0: #{tpu_custom_call.1}
  #allocation0 [shape = 'u32[]', space=smem, size = 0x4, offset = 0x4, fixed_abs, tag = 'smem constant byte address 0x4 - core index']
  #allocation1 [shape = 'u32[72,128]{1,0:T(1,128)}', space=vmem, size = 0x9000, scoped, tag = 'internal scratch']
  #allocation2 [shape = 'f32[1,1]{1,0:T(1,128)S(1)}', space=vmem, size = 0x200, scoped, tag = 'scoped memory for tpu_custom_call.1']
  %s0 = inlined_call_operand.hbm [shape: f32[2,4,256], index: 0, kind: input, shape index: {}]
  %s1 = inlined_call_operand.vmem [shape: f32[4,1], index: 1, kind: input, shape index: {}]
  %s2 = inlined_call_operand.<no memory space> [shape: f32[1,1], index: 2, kind: input, shape index: {}]
  %s3 = inlined_call_operand.vmem [shape: f32[4,1], index: 3, kind: input, shape index: {}]
  %s4 = inlined_call_operand.vmem [shape: f32[4,1], index: 4, kind: input, shape index: {}]
  %s5 = inlined_call_operand.hbm [shape: f32[2,4,256], index: 5, kind: output, shape index: {}]
  %s6 = sld [smem:[#allocation0]]
  $region57: #{tpu_custom_call.1} parent=0
    _
  %s8 = ssub.s32 1, %s6
  %s9 = scalar_select 0, %s8, %s6
  %v10 = vstv %s2
  %11 = vst [vmem:[#allocation2] sm:$0x1] %v10
  $region1: #{tpu_custom_call.1} parent=0
    #allocation3 [shape = 'u8[8192]{0}', space=vmem, size = 0x2000, scoped, tag = 'input window, operand 0']
    #allocation4 [shape = 's32[2]{0}', space=sflag, size = 0x8, scoped, tag = 'scoped memory for tpu_custom_call.1']
    #allocation5 [shape = 's32[2]{0}', space=sflag, size = 0x8, scoped, tag = 'scoped memory for tpu_custom_call.1']
    #allocation6 [shape = 'u8[8192]{0}', space=vmem, size = 0x2000, scoped, tag = 'output window, operand 0']
    %12 = vsyncpa [#allocation4], 0
    %s13 = scalar_lea.sflag [#allocation4], 1
    %14 = vsyncpa %s13, 0
    %15 = vsyncpa [#allocation5], 0
    %s16 = scalar_lea.sflag [#allocation5], 1
    %17 = vsyncpa %s16, 0
    loop: start=0, step=1, limit=4
    $region2: #{tpu_custom_call.1} parent=1 // loop_pre_header
      _
    $region3: #{tpu_custom_call.1} parent=1 // loop_header
      %s19 = sphi 0, %s23
      %p20 = scmp.ge.s32.totalorder %s19, 4
      %s29 = sphi 0, %s31
      %s32 = sphi 0, %s29
      %s33 = sphi 0, %s32
      %s49 = sphi 0, %s33
      %s53 = sphi 0, %s53
      %s55 = sphi 0, %s53
      %s56 = sphi 0, %s55
      %s70 = sphi 0, %s56
      %s74 = sphi 0, %s74
      %s76 = sphi 0, %s74
      %s77 = sphi 0, %s76
      %s91 = sphi 0, %s77
      %s95 = sphi 0, %s95
      %s97 = sphi 0, %s95
      %s98 = sphi 0, %s97
      %s112 = sphi 0, %s98
      %s116 = sphi 0, %s116
      %s118 = sphi 0, %s116
      %s119 = sphi 0, %s118
      %s133 = sphi 0, %s119
      %s139 = sphi 0, %s141
      %s142 = sphi 0, %s139
      %s143 = sphi 0, %s142
      %s159 = sphi 0, %s143
    $region4: #{tpu_custom_call.1} parent=1 // loop_header_branch
      %22 = sbr.rel (%p20) target = $region8
    $region5: #{tpu_custom_call.1} parent=1 // loop_body
      %s24 = ssub.s32 %s19, 1
      %s25 = ssub.s32 %s19, 2
      %s26 = sadd.s32 %s19, 1
      %s27 = ssub.s32 %s19, %s26
      %p28 = scmp.eq.s32.totalorder %s27, 0
      %s30 = sadd.s32 %s29, 1
      %s31 = scalar_select %p28, %s29, %s30
      %p34 = pneg %p28
      %p35 = scmp.eq.s32.totalorder %s19, 1
      %p36 = por %p34, %p35
      %p37 = scmp.ne.s32.totalorder %s29, %s32
      %p38 = scmp.eq.s32.totalorder %s19, 0
      %p39 = por %p37, %p38
      %p40 = scmp.ne.s32.totalorder %s29, %s32
      %p41 = scmp.eq.s32.totalorder %s24, 1
      %p42 = por %p40, %p41
      %p43 = scmp.ne.s32.totalorder %s32, %s33
      %p44 = scmp.eq.s32.totalorder %s24, 0
      %p45 = por %p43, %p44
      %p46 = scmp.ne.s32.totalorder %s32, %s33
      %p47 = scmp.eq.s32.totalorder %s25, 1
      %p48 = por %p46, %p47
      %p50 = scmp.ne.s32.totalorder %s33, %s49
      %p51 = scmp.eq.s32.totalorder %s25, 0
      %p52 = por %p50, %p51
      %s54 = sadd.s32 %s53, 1
      %p57 = scmp.eq.s32.totalorder %s19, 1
      %p58 = scmp.ne.s32.totalorder %s53, %s55
      %p59 = scmp.eq.s32.totalorder %s19, 0
      %p60 = por %p58, %p59
      %p61 = scmp.ne.s32.totalorder %s53, %s55
      %p62 = scmp.eq.s32.totalorder %s24, 1
      %p63 = por %p61, %p62
      %p64 = scmp.ne.s32.totalorder %s55, %s56
      %p65 = scmp.eq.s32.totalorder %s24, 0
      %p66 = por %p64, %p65
      %p67 = scmp.ne.s32.totalorder %s55, %s56
      %p68 = scmp.eq.s32.totalorder %s25, 1
      %p69 = por %p67, %p68
      %p71 = scmp.ne.s32.totalorder %s56, %s70
      %p72 = scmp.eq.s32.totalorder %s25, 0
      %p73 = por %p71, %p72
      %s75 = sadd.s32 %s74, 1
      %p78 = scmp.eq.s32.totalorder %s19, 1
      %p79 = scmp.ne.s32.totalorder %s74, %s76
      %p80 = scmp.eq.s32.totalorder %s19, 0
      %p81 = por %p79, %p80
      %p82 = scmp.ne.s32.totalorder %s74, %s76
      %p83 = scmp.eq.s32.totalorder %s24, 1
      %p84 = por %p82, %p83
      %p85 = scmp.ne.s32.totalorder %s76, %s77
      %p86 = scmp.eq.s32.totalorder %s24, 0
      %p87 = por %p85, %p86
      %p88 = scmp.ne.s32.totalorder %s76, %s77
      %p89 = scmp.eq.s32.totalorder %s25, 1
      %p90 = por %p88, %p89
      %p92 = scmp.ne.s32.totalorder %s77, %s91
      %p93 = scmp.eq.s32.totalorder %s25, 0
      %p94 = por %p92, %p93
      %s96 = sadd.s32 %s95, 1
      %p99 = scmp.eq.s32.totalorder %s19, 1
      %p100 = scmp.ne.s32.totalorder %s95, %s97
      %p101 = scmp.eq.s32.totalorder %s19, 0
      %p102 = por %p100, %p101
      %p103 = scmp.ne.s32.totalorder %s95, %s97
      %p104 = scmp.eq.s32.totalorder %s24, 1
      %p105 = por %p103, %p104
      %p106 = scmp.ne.s32.totalorder %s97, %s98
      %p107 = scmp.eq.s32.totalorder %s24, 0
      %p108 = por %p106, %p107
      %p109 = scmp.ne.s32.totalorder %s97, %s98
      %p110 = scmp.eq.s32.totalorder %s25, 1
      %p111 = por %p109, %p110
      %p113 = scmp.ne.s32.totalorder %s98, %s112
      %p114 = scmp.eq.s32.totalorder %s25, 0
      %p115 = por %p113, %p114
      %s117 = sadd.s32 %s116, 1
      %p120 = scmp.eq.s32.totalorder %s19, 1
      %p121 = scmp.ne.s32.totalorder %s116, %s118
      %p122 = scmp.eq.s32.totalorder %s19, 0
      %p123 = por %p121, %p122
      %p124 = scmp.ne.s32.totalorder %s116, %s118
      %p125 = scmp.eq.s32.totalorder %s24, 1
      %p126 = por %p124, %p125
      %p127 = scmp.ne.s32.totalorder %s118, %s119
      %p128 = scmp.eq.s32.totalorder %s24, 0
      %p129 = por %p127, %p128
      %p130 = scmp.ne.s32.totalorder %s118, %s119
      %p131 = scmp.eq.s32.totalorder %s25, 1
      %p132 = por %p130, %p131
      %p134 = scmp.ne.s32.totalorder %s119, %s133
      %p135 = scmp.eq.s32.totalorder %s25, 0
      %p136 = por %p134, %p135
      %s137 = ssub.s32 %s19, %s26
      %p138 = scmp.eq.s32.totalorder %s137, 0
      %s140 = sadd.s32 %s139, 1
      %s141 = scalar_select %p138, %s139, %s140
      %p144 = pneg %p138
      %p145 = scmp.eq.s32.totalorder %s19, 1
      %p146 = por %p144, %p145
      %p147 = scmp.ne.s32.totalorder %s139, %s142
      %p148 = scmp.eq.s32.totalorder %s19, 0
      %p149 = por %p147, %p148
      %p150 = scmp.ne.s32.totalorder %s139, %s142
      %p151 = scmp.eq.s32.totalorder %s24, 1
      %p152 = por %p150, %p151
      %p153 = scmp.ne.s32.totalorder %s142, %s143
      %p154 = scmp.eq.s32.totalorder %s24, 0
      %p155 = por %p153, %p154
      %p156 = scmp.ne.s32.totalorder %s142, %s143
      %p157 = scmp.eq.s32.totalorder %s25, 1
      %p158 = por %p156, %p157
      %p160 = scmp.ne.s32.totalorder %s143, %s159
      %p161 = scmp.eq.s32.totalorder %s25, 0
      %p162 = por %p160, %p161
      %p163 = scmp.le.s32.totalorder 1, %s19
      %p164 = scmp.lt.s32.totalorder %s19, 3
      %p165 = pnand %p163, %p164
      %p166 = pneg %p165
      // Predicated region
      $region9: #{tpu_custom_call.1} parent=5 // pred_check
        _
      $region10: #{tpu_custom_call.1} parent=5 // pred_check_branch
        %168 = sbr.rel (%p165) target = $region12
      $region11: #{tpu_custom_call.1} parent=5 // pred_region
        %s169 = ssub.s32 %s19, 1
        // Predicated region
        $region13: #{tpu_custom_call.1} parent=11 // pred_check
          %p170 = pneg %p66
        $region14: #{tpu_custom_call.1} parent=11 // pred_check_branch
          %172 = sbr.rel (%p170) target = $region16
        $region15: #{tpu_custom_call.1} parent=11 // pred_region
          _
        $region16: #{tpu_custom_call.1} parent=11 // pred_fallthru
          _
        // Predicated region
        $region17: #{tpu_custom_call.1} parent=11 // pred_check
          %p173 = pneg %p87
        $region18: #{tpu_custom_call.1} parent=11 // pred_check_branch
          %175 = sbr.rel (%p173) target = $region20
        $region19: #{tpu_custom_call.1} parent=11 // pred_region
          _
        $region20: #{tpu_custom_call.1} parent=11 // pred_fallthru
          _
        // Predicated region
        $region21: #{tpu_custom_call.1} parent=11 // pred_check
          %p176 = pneg %p108
        $region22: #{tpu_custom_call.1} parent=11 // pred_check_branch
          %178 = sbr.rel (%p176) target = $region24
        $region23: #{tpu_custom_call.1} parent=11 // pred_region
          _
        $region24: #{tpu_custom_call.1} parent=11 // pred_fallthru
          _
        // Predicated region
        $region25: #{tpu_custom_call.1} parent=11 // pred_check
          %p179 = pneg %p129
        $region26: #{tpu_custom_call.1} parent=11 // pred_check_branch
          %181 = sbr.rel (%p179) target = $region28
        $region27: #{tpu_custom_call.1} parent=11 // pred_region
          _
        $region28: #{tpu_custom_call.1} parent=11 // pred_fallthru
          _
      $region12: #{tpu_custom_call.1} parent=5 // pred_fallthru
        _
      %p182 = scmp.lt.s32.totalorder %s19, 2
      // Predicated region
      $region29: #{tpu_custom_call.1} parent=5 // pred_check
        %p183 = pneg %p182
      $region30: #{tpu_custom_call.1} parent=5 // pred_check_branch
        %185 = sbr.rel (%p183) target = $region32
      $region31: #{tpu_custom_call.1} parent=5 // pred_region
        // Predicated region
        $region33: #{tpu_custom_call.1} parent=31 // pred_check
          %p186 = pneg %p39
        $region34: #{tpu_custom_call.1} parent=31 // pred_check_branch
          %188 = sbr.rel (%p186) target = $region36
        $region35: #{tpu_custom_call.1} parent=31 // pred_region
          %s189 = sand.u32 %s29, 1
          %s190 = scalar_lea.sflag [#allocation4], %s189
          %s191 = sand.u32 %s29, 1
          %s192 = smul.addr %s191, 8
          %s193 = scalar_lea.vmem [#allocation3], %s192
          %195 = vsyncadd %s190, 0
          %s196 = smul.addr %s19, 2
          %s197 = smul.addr %s196, 4
          %s198 = scalar_lea.hbm %s0, %s197
          %s200 = sshll.u32 %s198, 4
          %s201 = int_to_ptr.hbm [resolvable:$true] %s200
          %s202 = sshll.u32 %s193, 4
          %s203 = int_to_ptr.vmem [resolvable:$true] %s202
          %205 = dma.hbm_to_vmem [thread:$0]  %s201, 128, %s203, %s190
        $region36: #{tpu_custom_call.1} parent=31 // pred_fallthru
          _
      $region32: #{tpu_custom_call.1} parent=5 // pred_fallthru
        _
      %p206 = scmp.le.s32.totalorder 1, %s19
      %p207 = scmp.lt.s32.totalorder %s19, 3
      %p208 = pnand %p206, %p207
      %p209 = pneg %p208
      // Predicated region
      $region37: #{tpu_custom_call.1} parent=5 // pred_check
        _
      $region38: #{tpu_custom_call.1} parent=5 // pred_check_branch
        %211 = sbr.rel (%p208) target = $region40
      $region39: #{tpu_custom_call.1} parent=5 // pred_region
        %s212 = ssub.s32 %s19, 1
        %s213 = sand.u32 %s32, 1
        %s214 = scalar_lea.sflag [#allocation4], %s213
        %s215 = sand.u32 %s32, 1
        %s216 = smul.addr %s215, 8
        %s217 = scalar_lea.vmem [#allocation3], %s216
        // Predicated region
        $region41: #{tpu_custom_call.1} parent=39 // pred_check
          %p218 = pneg %p45
        $region42: #{tpu_custom_call.1} parent=39 // pred_check_branch
          %220 = sbr.rel (%p218) target = $region44
        $region43: #{tpu_custom_call.1} parent=39 // pred_region
          %222 = dma.done %s214, 128
        $region44: #{tpu_custom_call.1} parent=39 // pred_fallthru
          _
        %s223 = sand.u32 %s32, 1
        %s224 = scalar_lea.sflag [#allocation4], %s223
        %s225 = sand.u32 %s32, 1
        %s226 = smul.addr %s225, 8
        %s227 = scalar_lea.vmem [#allocation3], %s226
        %p228 = pneg %p45
        %p229 = pneg %p42
        %p230 = pneg %p66
        %p231 = pneg %p63
        %p232 = pneg %p87
        %p233 = pneg %p84
        %p234 = pneg %p108
        %p235 = pneg %p105
        %p236 = pneg %p129
        %p237 = pneg %p126
        %p238 = pneg %p155
        %p239 = pneg %p152
        %s240 = sand.u32 %s142, 1
        %s241 = scalar_lea.sflag [#allocation5], %s240
        %s242 = sand.u32 %s142, 1
        %s243 = smul.addr %s242, 8
        %s244 = scalar_lea.vmem [#allocation6], %s243
        %v245 = vld [vmem:[%s217] sm:$0xff]
        %247 = vst [vmem:[#allocation1] ss:$2 sm:$0xff] %v245
        %v248 = vld.sshfl [vmem:[#allocation1] sm:$0xff pattern:$0x75316420]
        %v249 = vld.sshfl [vmem:[#allocation1 + $0x8] sm:$0xff pattern:$0x75316420]
        %vm252 = vcmask 1043456
        %v253 = vsel %vm252, %v248, 0.0
        %v254 = vsel %vm252, %v249, 0.0
        %v255 = vadd.f32 %v253, %v254
        %256 = vadd.xlane.f32.xlu0 %v255
        %v257 = vpop.xlane.xlu0 %256
        %v258 = vmul.f32 %v257, 0.00390625
        %v259 = vld [vmem:[%s1] sm:$0xf]
        %v260 = vld [vmem:[#allocation2] sm:$0x1]
        %v261 = vld [vmem:[%s3] sm:$0xf]
        %v262 = vld [vmem:[%s4] sm:$0xf]
        %v263 = vmul.f32 %v259, %v258
        %vm264 = vcmask 3072
        %v265 = vsel %vm264, %v263, 0.0
        %v266 = vrot.slane %v265, 4
        %v267 = vadd.f32 %v265, %v266
        %v268 = vrot.slane %v267, 2
        %v269 = vadd.f32 %v267, %v268
        %v270 = vrot.slane %v269, 1
        %v271 = vadd.f32 %v269, %v270
        %v272 = vadd.f32 %v271, %v260
        %v273 = vmax.f32 %v272, 0.0
        %v274 = vperm.slane %v273, 0
        %v275 = vmul.f32 %v261, %v274
        %v276 = vadd.f32 %v275, 0.0
        %v277 = vadd.f32 %v276, %v262
        %v278 = vxor.u32 %v277, 2147483648
        %v279 = vmul.f32 %v278, 1.442695
        %v280 = vpow.pop %v279
        %v281 = vadd.f32 %v280, 1.0
        %v282 = vrcp.pop %v281
        %v283 = vmul.f32 %v281, %v282
        %v284 = vsub.f32 1.0, %v283
        %v285 = vmul.f32 %v282, %v284
        %v286 = vadd.f32 %v282, %v285
        %vm287 = vweird.f32 %v281
        %vm288 = vweird.f32 %v282
        %vm289 = vmor %vm287, %vm288
        %v290 = vsel %vm289, %v282, %v286
        %v291 = vand.u32 2147483647, %v281
        %vm292 = vcmp.eq.f32.partialorder %v291, 8.507059e+37
        %v293 = vand.u32 %v281, 2147483648
        %v294 = vor.u32 1.1754944e-38, %v293
        %v295 = vsel %vm292, %v294, %v290
        %v296 = vmul.f32 1.0, %v295
        %298 = vset.pattern.permute.xlu0 0
        %299 = vperm.xlu0 %298, %v296
        %v300 = vpop.permute.xlu0 %299
        %v302 = vunpack.c.l.s4 839922192
        %v303 = vunpack.c.0.s8 %v302
        %v304 = vperm.slane %v300, %v303
        %v306 = vmul.f32 %v245, %v304
        %307 = vst [vmem:[%s244] sm:$0xff] %v306
        %s308 = sand.u32 %s142, 1
        %s309 = scalar_lea.sflag [#allocation5], %s308
        %s310 = sand.u32 %s142, 1
        %s311 = smul.addr %s310, 8
        %s312 = scalar_lea.vmem [#allocation6], %s311
        // Predicated region
        $region45: #{tpu_custom_call.1} parent=39 // pred_check
          %p313 = pneg %p152
        $region46: #{tpu_custom_call.1} parent=39 // pred_check_branch
          %315 = sbr.rel (%p313) target = $region48
        $region47: #{tpu_custom_call.1} parent=39 // pred_region
          %317 = vsyncadd %s309, 0
          %s318 = smul.addr %s24, 2
          %s319 = smul.addr %s318, 4
          %s320 = scalar_lea.hbm %s5, %s319
          %s322 = sshll.u32 %s312, 4
          %s323 = int_to_ptr.vmem [resolvable:$true] %s322
          %s324 = sshll.u32 %s320, 4
          %s325 = int_to_ptr.hbm [resolvable:$true] %s324
          %327 = dma.vmem_to_hbm [thread:$0]  %s323, 128, %s325, %s309
        $region48: #{tpu_custom_call.1} parent=39 // pred_fallthru
          _
      $region40: #{tpu_custom_call.1} parent=5 // pred_fallthru
        _
      %p328 = scmp.le.s32.totalorder 2, %s19
      // Predicated region
      $region49: #{tpu_custom_call.1} parent=5 // pred_check
        %p329 = pneg %p328
      $region50: #{tpu_custom_call.1} parent=5 // pred_check_branch
        %331 = sbr.rel (%p329) target = $region52
      $region51: #{tpu_custom_call.1} parent=5 // pred_region
        %s332 = ssub.s32 %s19, 2
        // Predicated region
        $region53: #{tpu_custom_call.1} parent=51 // pred_check
          %p333 = pneg %p158
        $region54: #{tpu_custom_call.1} parent=51 // pred_check_branch
          %335 = sbr.rel (%p333) target = $region56
        $region55: #{tpu_custom_call.1} parent=51 // pred_region
          %s336 = sand.u32 %s143, 1
          %s337 = scalar_lea.sflag [#allocation5], %s336
          %s338 = sand.u32 %s143, 1
          %s339 = smul.addr %s338, 8
          %s340 = scalar_lea.vmem [#allocation6], %s339
          %342 = dma.done %s337, 128
        $region56: #{tpu_custom_call.1} parent=51 // pred_fallthru
          _
      $region52: #{tpu_custom_call.1} parent=5 // pred_fallthru
        _
    $region6: #{tpu_custom_call.1} parent=1 // loop_footer
      %s23 = sadd.s32 1, %s19
    $region7: #{tpu_custom_call.1} parent=1 // loop_footer_branch
      %18 = sbr.rel target = $region3
    $region8: #{tpu_custom_call.1} parent=1 // loop_exit
      _
    %343 = vsyncpa [#allocation4], 1
    %s344 = scalar_lea.sflag [#allocation4], 1
    %345 = vsyncpa %s344, 1
    %346 = vsyncpa [#allocation5], 1
    %s347 = scalar_lea.sflag [#allocation5], 1
    %348 = vsyncpa %s347, 1

</llo_original>
